<compile_context>
chip_gen: v5e
topology: v5e:2x2
jax: 0.10.0
libtpu: 0.0.40
codegen_flags: <defaults>
</compile_context>

<pallas_src>
import functools

import jax
import jax.numpy as jnp
from jax.experimental import pallas as pl
from jax.experimental.pallas import tpu as pltpu


def head_kernel(x_ref, wqkv_ref, o_ref, *, compute_dtype):
    # x_ref: (Bb, T, C)   wqkv_ref: (C, 3H) packed [Wq | Wk | Wv]   o_ref: (Bb, T, H)
    Bb, T, C = x_ref.shape
    H = o_ref.shape[-1]

    # Fused QKV projection: fold batch into the MXU M dimension (Bb*T rows).
    x2d = x_ref[...].reshape(Bb * T, C).astype(compute_dtype)           # (Bb*T, C)
    w = wqkv_ref[...].astype(compute_dtype)                             # (C, 3H)
    qkv = jnp.dot(x2d, w, preferred_element_type=jnp.float32)           # (Bb*T, 3H) f32
    qkv = qkv.reshape(Bb, T, 3 * H)

    scale = C ** (-0.5)                      # PyTorch scales by C = n_embed here
    q = (qkv[:, :, 0 * H:1 * H] * scale).astype(compute_dtype)          # scale folded into q
    k = qkv[:, :, 1 * H:2 * H].astype(compute_dtype)
    v = qkv[:, :, 2 * H:3 * H].astype(compute_dtype)

    # Scores, batched over Bb, f32 accumulation on the MXU.
    s = jnp.einsum("bqd,bkd->bqk", q, k,
                   preferred_element_type=jnp.float32)                  # (Bb, T, T)

    # Causal (lower-triangular) mask; large finite value avoids NaN.
    row = jax.lax.broadcasted_iota(jnp.int32, (T, T), 0)
    col = jax.lax.broadcasted_iota(jnp.int32, (T, T), 1)
    s = jnp.where((col <= row)[None, :, :], s, -1e30)

    # Numerically stable softmax in f32.  The approximate EUP reciprocal is only
    # used on the low-precision fast path; the f32 path stays exact.
    s = s - jnp.max(s, axis=-1, keepdims=True)
    p = jnp.exp(s)
    denom = jnp.sum(p, axis=-1, keepdims=True)
    use_approx = compute_dtype != jnp.float32
    p = p * pl.reciprocal(denom, approx=use_approx)

    # TODO(synk): training-mode dropout (p=0.2) with TPU PRNG is not implemented;
    #             PyTorch eval() semantics (identity) are reproduced instead.
    out = jnp.einsum("bqk,bkd->bqd", p.astype(compute_dtype), v,
                     preferred_element_type=jnp.float32)                # (Bb, T, H)
    o_ref[...] = out.astype(o_ref.dtype)


def _pick_batch_block(B, T, min_rows=128):
    """Smallest divisor of B such that bb*T >= min_rows (good MXU fill) while
    keeping as many grid steps as possible (megacore); falls back to B."""
    for bb in range(1, B + 1):
        if B % bb == 0 and bb * T >= min_rows:
            return bb
    return B


def head_forward(x, wk, wq, wv, *, compute_dtype=jnp.bfloat16, batch_block=None):
    """x: (B, T, C) f32; wk/wq/wv: (C, H) f32 (transposed nn.Linear weights)."""
    B, T, C = x.shape
    H = wk.shape[1]
    w_qkv = jnp.concatenate([wq, wk, wv], axis=1)          # (C, 3H), order [q | k | v]

    Bb = batch_block if batch_block is not None else _pick_batch_block(B, T)
    assert B % Bb == 0

    kernel = functools.partial(head_kernel, compute_dtype=compute_dtype)
    return pl.pallas_call(
        kernel,
        out_shape=jax.ShapeDtypeStruct((B, T, H), x.dtype),
        grid_spec=pltpu.PrefetchScalarGridSpec(
            num_scalar_prefetch=0,
            grid=(B // Bb,),
            in_specs=[
                pl.BlockSpec((Bb, T, C), lambda b: (b, 0, 0)),
                pl.BlockSpec((C, 3 * H), lambda b: (0, 0)),
            ],
            out_specs=pl.BlockSpec((Bb, T, H), lambda b: (b, 0, 0)),
        ),
        compiler_params=pltpu.CompilerParams(
            dimension_semantics=("parallel",)),
    )(x, w_qkv)


def head_reference(x, wk, wq, wv):
    """Pure-JAX f32 reference mirroring the PyTorch forward (eval mode).

    HIGHEST precision so the reference is accurate f32 even on TPU (where the
    default matmul precision uses bf16 MXU passes)."""
    B, T, C = x.shape
    hp = jax.lax.Precision.HIGHEST
    k = jnp.dot(x, wk, precision=hp)
    q = jnp.dot(x, wq, precision=hp)
    v = jnp.dot(x, wv, precision=hp)
    wei = jnp.einsum("btd,bsd->bts", q, k, precision=hp) * (C ** -0.5)
    mask = jnp.tril(jnp.ones((T, T), dtype=bool))
    wei = jnp.where(mask, wei, -jnp.inf)
    wei = jax.nn.softmax(wei, axis=-1)
    return jnp.einsum("bts,bsd->btd", wei, v, precision=hp)


if __name__ == "__main__":
    # Shapes consistent with the module: C = n_embed = 384, head_size = 64,
    # T <= block_size (=256); kept small for the test.
    B, T, C, H = 8, 32, 384, 64

    key = jax.random.PRNGKey(0)
    kx, kk, kq, kv = jax.random.split(key, 4)
    x = jax.random.normal(kx, (B, T, C), dtype=jnp.float32)
    # nn.Linear(n_embed, head_size, bias=False) weight is (H, C); store (C, H).
    wk = jax.random.normal(kk, (C, H), dtype=jnp.float32) * (C ** -0.5)
    wq = jax.random.normal(kq, (C, H), dtype=jnp.float32) * (C ** -0.5)
    wv = jax.random.normal(kv, (C, H), dtype=jnp.float32) * (C ** -0.5)

    ref = head_reference(x, wk, wq, wv)

    # Default fast path: bf16 MXU inputs, f32 accumulation / softmax.
    out_bf16 = jax.block_until_ready(head_forward(x, wk, wq, wv))
    assert out_bf16.shape == (B, T, H)
    assert jnp.allclose(out_bf16, ref, atol=3e-2, rtol=3e-2), "bf16 path mismatch"

    # Full-f32 path (exact softmax reciprocal; tolerance covers MXU f32 rounding).
    out_f32 = jax.block_until_ready(
        head_forward(x, wk, wq, wv, compute_dtype=jnp.float32))
    assert jnp.allclose(out_f32, ref, atol=5e-3, rtol=5e-3), "f32 path mismatch"

    print("KERNEL_OK")
</pallas_src>

<mosaic_0001>
module attributes {stable_mosaic.version = 11 : i64} {
  func.func @head_kernel(%arg0: i32, %arg1: memref<4x32x384xf32, #tpu.memory_space<vmem>>, %arg2: memref<384x192xf32, #tpu.memory_space<vmem>>, %arg3: memref<4x32x64xf32, #tpu.memory_space<vmem>>) attributes {dimension_semantics = [#tpu.dimension_semantics<parallel>], iteration_bounds = array<i64: 2>, scalar_prefetch = 0 : i64, scratch_operands = 0 : i64, tpu.core_type = #tpu.core_type<tc>, window_params = [{transform_indices = @transform_0, window_bounds = array<i64: 4, 32, 384>}, {pipeline_mode = #tpu.pipeline_mode<synchronous>, transform_indices = @transform_1, window_bounds = array<i64: 384, 192>}, {transform_indices = @transform_2, window_bounds = array<i64: 4, 32, 64>}]} {
    %c0 = arith.constant 0 : index
    %c0_0 = arith.constant 0 : index
    %c0_1 = arith.constant 0 : index
    %0 = vector.load %arg1[%c0, %c0_0, %c0_1] : memref<4x32x384xf32, #tpu.memory_space<vmem>>, vector<4x32x384xf32>
    %1 = vector.shape_cast %0 : vector<4x32x384xf32> to vector<128x384xf32>
    %2 = arith.truncf %1 : vector<128x384xf32> to vector<128x384xbf16>
    %c0_2 = arith.constant 0 : index
    %c0_3 = arith.constant 0 : index
    %3 = vector.load %arg2[%c0_2, %c0_3] : memref<384x192xf32, #tpu.memory_space<vmem>>, vector<384x192xf32>
    %4 = arith.truncf %3 : vector<384x192xf32> to vector<384x192xbf16>
    %cst = arith.constant dense<0.000000e+00> : vector<128x192xf32>
    %5 = tpu.matmul %2, %4, %cst {dimension_numbers = #tpu.dot_dimension_numbers<[1], [0], [0], [1], [0, 0, 1, 1], [], []>} : vector<128x384xbf16>, vector<384x192xbf16>, vector<128x192xf32> -> vector<128x192xf32>
    %6 = vector.shape_cast %5 : vector<128x192xf32> to vector<4x32x192xf32>
    %7 = vector.extract_strided_slice %6 {offsets = [0, 0, 0], sizes = [4, 32, 64], strides = [1, 1, 1]} : vector<4x32x192xf32> to vector<4x32x64xf32>
    %cst_4 = arith.constant 0.0510310382 : f32
    %8 = vector.broadcast %cst_4 : f32 to vector<4x32x64xf32>
    %9 = arith.mulf %7, %8 : vector<4x32x64xf32>
    %10 = arith.truncf %9 : vector<4x32x64xf32> to vector<4x32x64xbf16>
    %11 = vector.extract_strided_slice %6 {offsets = [0, 0, 64], sizes = [4, 32, 64], strides = [1, 1, 1]} : vector<4x32x192xf32> to vector<4x32x64xf32>
    %12 = arith.truncf %11 : vector<4x32x64xf32> to vector<4x32x64xbf16>
    %13 = vector.extract_strided_slice %6 {offsets = [0, 0, 128], sizes = [4, 32, 64], strides = [1, 1, 1]} : vector<4x32x192xf32> to vector<4x32x64xf32>
    %14 = arith.truncf %13 : vector<4x32x64xf32> to vector<4x32x64xbf16>
    "tpu.trace_start"() <{level = 10 : i32, message = "bqd,bkd->bqk"}> : () -> ()
    %cst_5 = arith.constant dense<0.000000e+00> : vector<4x32x32xf32>
    %15 = tpu.matmul %10, %12, %cst_5 {dimension_numbers = #tpu.dot_dimension_numbers<[2], [2], [1], [1], [0, 0, 0, 1, 1, 1], [0], [0]>} : vector<4x32x64xbf16>, vector<4x32x64xbf16>, vector<4x32x32xf32> -> vector<4x32x32xf32>
    "tpu.trace_stop"() : () -> ()
    %16 = tpu.iota {dimensions = array<i32: 0>} : vector<32x32xi32>
    %17 = tpu.iota {dimensions = array<i32: 1>} : vector<32x32xi32>
    %18 = arith.cmpi sle, %17, %16 : vector<32x32xi32>
    %19 = vector.shape_cast %18 : vector<32x32xi1> to vector<1x32x32xi1>
    %cst_6 = arith.constant -1.000000e+30 : f32
    %20 = vector.shape_cast %19 : vector<1x32x32xi1> to vector<1x32x32xi1>
    %21 = vector.broadcast %20 : vector<1x32x32xi1> to vector<4x32x32xi1>
    %22 = vector.broadcast %cst_6 : f32 to vector<4x32x32xf32>
    %23 = arith.select %21, %15, %22 : vector<4x32x32xi1>, vector<4x32x32xf32>
    %cst_7 = arith.constant dense<0xFF800000> : vector<4x32xf32>
    %24 = vector.multi_reduction <maximumf>, %23, %cst_7 [2] : vector<4x32x32xf32> to vector<4x32xf32>
    %25 = vector.shape_cast %24 : vector<4x32xf32> to vector<4x32x1xf32>
    %26 = vector.broadcast %25 : vector<4x32x1xf32> to vector<4x32x32xf32>
    %27 = arith.subf %23, %26 : vector<4x32x32xf32>
    %28 = math.exp %27 : vector<4x32x32xf32>
    %cst_8 = arith.constant dense<0.000000e+00> : vector<4x32xf32>
    %29 = vector.multi_reduction <add>, %28, %cst_8 [2] : vector<4x32x32xf32> to vector<4x32xf32>
    %30 = vector.shape_cast %29 : vector<4x32xf32> to vector<4x32x1xf32>
    %31 = tpu.reciprocal %30 {approx = true} : vector<4x32x1xf32> -> vector<4x32x1xf32>
    %32 = vector.broadcast %31 : vector<4x32x1xf32> to vector<4x32x32xf32>
    %33 = arith.mulf %28, %32 : vector<4x32x32xf32>
    %34 = arith.truncf %33 : vector<4x32x32xf32> to vector<4x32x32xbf16>
    "tpu.trace_start"() <{level = 10 : i32, message = "bqk,bkd->bqd"}> : () -> ()
    %cst_9 = arith.constant dense<0.000000e+00> : vector<4x32x64xf32>
    %35 = tpu.matmul %34, %14, %cst_9 {dimension_numbers = #tpu.dot_dimension_numbers<[2], [1], [1], [2], [0, 0, 0, 1, 1, 2], [0], [0]>} : vector<4x32x32xbf16>, vector<4x32x64xbf16>, vector<4x32x64xf32> -> vector<4x32x64xf32>
    "tpu.trace_stop"() : () -> ()
    %c0_10 = arith.constant 0 : index
    %c0_11 = arith.constant 0 : index
    %c0_12 = arith.constant 0 : index
    %36 = vector.load %arg3[%c0_10, %c0_11, %c0_12] : memref<4x32x64xf32, #tpu.memory_space<vmem>>, vector<4x32x64xf32>
    tpu.vector_store %arg3[%c0_10, %c0_11, %c0_12], %35 {strides = array<i32>} : memref<4x32x64xf32, #tpu.memory_space<vmem>>, vector<4x32x64xf32>,
    return
  }
  func.func @transform_0(%arg0: i32) -> (i32, i32, i32) {
    %c0_i32 = arith.constant 0 : i32
    %c0_i32_0 = arith.constant 0 : i32
    %c0_i32_1 = arith.constant 0 : i32
    return %arg0, %c0_i32, %c0_i32_0 : i32, i32, i32
  }
  func.func @transform_1(%arg0: i32) -> (i32, i32) {
    %c0_i32 = arith.constant 0 : i32
    %c0_i32_0 = arith.constant 0 : i32
    %c0_i32_1 = arith.constant 0 : i32
    return %c0_i32, %c0_i32_0 : i32, i32
  }
  func.func @transform_2(%arg0: i32) -> (i32, i32, i32) {
    %c0_i32 = arith.constant 0 : i32
    %c0_i32_0 = arith.constant 0 : i32
    %c0_i32_1 = arith.constant 0 : i32
    return %arg0, %c0_i32, %c0_i32_0 : i32, i32, i32
  }
}

</mosaic_0001>

<llo_original>
// kernel: tpu_custom_call.1
$region0: #{tpu_custom_call.1}
  #allocation0 [shape = 'u32[]', space=smem, size = 0x4, offset = 0x4, fixed_abs, tag = 'smem constant byte address 0x4 - core index']
  #allocation1 [shape = 'u32[72,128]{1,0:T(1,128)}', space=vmem, size = 0x9000, scoped, tag = 'internal scratch']
  %s0 = inlined_call_operand.vmem [shape: f32[8,32,384], index: 0, kind: input, shape index: {}]
  %s1 = inlined_call_operand.vmem [shape: f32[384,192], index: 1, kind: input, shape index: {}]
  %s2 = inlined_call_operand.hbm [shape: f32[8,32,64], index: 2, kind: output, shape index: {}]
  %s3 = sld [smem:[#allocation0]]
  $region41: #{tpu_custom_call.1} parent=0
    _
  %s5 = ssub.s32 1, %s3
  %s6 = scalar_select 0, %s5, %s3
  $region1: #{tpu_custom_call.1} parent=0
    #allocation2 [shape = 'u8[131072]{0}', space=vmem, size = 0x20000, scoped, tag = 'output window, operand 0']
    #allocation3 [shape = 's32[2]{0}', space=sflag, size = 0x8, scoped, tag = 'scoped memory for tpu_custom_call.1']
    %7 = vsyncpa [#allocation3], 0
    %s8 = scalar_lea.sflag [#allocation3], 1
    %9 = vsyncpa %s8, 0
    loop: start=0, step=1, limit=4
    $region2: #{tpu_custom_call.1} parent=1 // loop_pre_header
      _
    $region3: #{tpu_custom_call.1} parent=1 // loop_header
      %s11 = sphi 0, %s15
      %p12 = scmp.ge.s32.totalorder %s11, 4
      %s21 = sphi 0, %s23
      %s24 = sphi 0, %s21
      %s25 = sphi 0, %s24
      %s41 = sphi 0, %s25
      %s45 = sphi 0, %s45
      %s47 = sphi 0, %s45
      %s48 = sphi 0, %s47
      %s62 = sphi 0, %s48
      %s68 = sphi 0, %s70
      %s71 = sphi 0, %s68
      %s72 = sphi 0, %s71
      %s88 = sphi 0, %s72
    $region4: #{tpu_custom_call.1} parent=1 // loop_header_branch
      %14 = sbr.rel (%p12) target = $region8
    $region5: #{tpu_custom_call.1} parent=1 // loop_body
      %s16 = ssub.s32 %s11, 1
      %s17 = ssub.s32 %s11, 2
      %s18 = sadd.s32 %s11, 1
      %s19 = ssub.s32 %s11, %s18
      %p20 = scmp.eq.s32.totalorder %s19, 0
      %s22 = sadd.s32 %s21, 1
      %s23 = scalar_select %p20, %s21, %s22
      %p26 = pneg %p20
      %p27 = scmp.eq.s32.totalorder %s11, 1
      %p28 = por %p26, %p27
      %p29 = scmp.ne.s32.totalorder %s21, %s24
      %p30 = scmp.eq.s32.totalorder %s11, 0
      %p31 = por %p29, %p30
      %p32 = scmp.ne.s32.totalorder %s21, %s24
      %p33 = scmp.eq.s32.totalorder %s16, 1
      %p34 = por %p32, %p33
      %p35 = scmp.ne.s32.totalorder %s24, %s25
      %p36 = scmp.eq.s32.totalorder %s16, 0
      %p37 = por %p35, %p36
      %p38 = scmp.ne.s32.totalorder %s24, %s25
      %p39 = scmp.eq.s32.totalorder %s17, 1
      %p40 = por %p38, %p39
      %p42 = scmp.ne.s32.totalorder %s25, %s41
      %p43 = scmp.eq.s32.totalorder %s17, 0
      %p44 = por %p42, %p43
      %s46 = sadd.s32 %s45, 1
      %p49 = scmp.eq.s32.totalorder %s11, 1
      %p50 = scmp.ne.s32.totalorder %s45, %s47
      %p51 = scmp.eq.s32.totalorder %s11, 0
      %p52 = por %p50, %p51
      %p53 = scmp.ne.s32.totalorder %s45, %s47
      %p54 = scmp.eq.s32.totalorder %s16, 1
      %p55 = por %p53, %p54
      %p56 = scmp.ne.s32.totalorder %s47, %s48
      %p57 = scmp.eq.s32.totalorder %s16, 0
      %p58 = por %p56, %p57
      %p59 = scmp.ne.s32.totalorder %s47, %s48
      %p60 = scmp.eq.s32.totalorder %s17, 1
      %p61 = por %p59, %p60
      %p63 = scmp.ne.s32.totalorder %s48, %s62
      %p64 = scmp.eq.s32.totalorder %s17, 0
      %p65 = por %p63, %p64
      %s66 = ssub.s32 %s11, %s18
      %p67 = scmp.eq.s32.totalorder %s66, 0
      %s69 = sadd.s32 %s68, 1
      %s70 = scalar_select %p67, %s68, %s69
      %p73 = pneg %p67
      %p74 = scmp.eq.s32.totalorder %s11, 1
      %p75 = por %p73, %p74
      %p76 = scmp.ne.s32.totalorder %s68, %s71
      %p77 = scmp.eq.s32.totalorder %s11, 0
      %p78 = por %p76, %p77
      %p79 = scmp.ne.s32.totalorder %s68, %s71
      %p80 = scmp.eq.s32.totalorder %s16, 1
      %p81 = por %p79, %p80
      %p82 = scmp.ne.s32.totalorder %s71, %s72
      %p83 = scmp.eq.s32.totalorder %s16, 0
      %p84 = por %p82, %p83
      %p85 = scmp.ne.s32.totalorder %s71, %s72
      %p86 = scmp.eq.s32.totalorder %s17, 1
      %p87 = por %p85, %p86
      %p89 = scmp.ne.s32.totalorder %s72, %s88
      %p90 = scmp.eq.s32.totalorder %s17, 0
      %p91 = por %p89, %p90
      %p92 = scmp.le.s32.totalorder 1, %s11
      %p93 = scmp.lt.s32.totalorder %s11, 3
      %p94 = pnand %p92, %p93
      %p95 = pneg %p94
      // Predicated region
      $region9: #{tpu_custom_call.1} parent=5 // pred_check
        _
      $region10: #{tpu_custom_call.1} parent=5 // pred_check_branch
        %97 = sbr.rel (%p94) target = $region12
      $region11: #{tpu_custom_call.1} parent=5 // pred_region
        %s98 = ssub.s32 %s11, 1
        // Predicated region
        $region13: #{tpu_custom_call.1} parent=11 // pred_check
          %p99 = pneg %p58
        $region14: #{tpu_custom_call.1} parent=11 // pred_check_branch
          %101 = sbr.rel (%p99) target = $region16
        $region15: #{tpu_custom_call.1} parent=11 // pred_region
          _
        $region16: #{tpu_custom_call.1} parent=11 // pred_fallthru
          _
      $region12: #{tpu_custom_call.1} parent=5 // pred_fallthru
        _
      %p102 = scmp.lt.s32.totalorder %s11, 2
      // Predicated region
      $region17: #{tpu_custom_call.1} parent=5 // pred_check
        %p103 = pneg %p102
      $region18: #{tpu_custom_call.1} parent=5 // pred_check_branch
        %105 = sbr.rel (%p103) target = $region20
      $region19: #{tpu_custom_call.1} parent=5 // pred_region
        // Predicated region
        $region21: #{tpu_custom_call.1} parent=19 // pred_check
          %p106 = pneg %p31
        $region22: #{tpu_custom_call.1} parent=19 // pred_check_branch
          %108 = sbr.rel (%p106) target = $region24
        $region23: #{tpu_custom_call.1} parent=19 // pred_region
          %s109 = smul.u32 4, %s11
          %p110 = scmp.lt.s32.totalorder %s109, 7
          %s111 = scalar_select %p110, %s109, 7
          %s112 = smul.addr %s111, 12
          %s113 = smul.addr %s112, 8
          %s114 = scalar_lea.vmem %s0, %s113
          %s115 = smul.u32 4, %s11
        $region24: #{tpu_custom_call.1} parent=19 // pred_fallthru
          _
      $region20: #{tpu_custom_call.1} parent=5 // pred_fallthru
        _
      %p116 = scmp.le.s32.totalorder 1, %s11
      %p117 = scmp.lt.s32.totalorder %s11, 3
      %p118 = pnand %p116, %p117
      %p119 = pneg %p118
      // Predicated region
      $region25: #{tpu_custom_call.1} parent=5 // pred_check
        _
      $region26: #{tpu_custom_call.1} parent=5 // pred_check_branch
        %121 = sbr.rel (%p118) target = $region28
      $region27: #{tpu_custom_call.1} parent=5 // pred_region
        %s122 = ssub.s32 %s11, 1
        %s123 = smul.u32 4, %s16
        %p124 = scmp.lt.s32.totalorder %s123, 7
        %s125 = scalar_select %p124, %s123, 7
        %s126 = smul.addr %s125, 12
        %s127 = smul.addr %s126, 8
        %s128 = scalar_lea.vmem %s0, %s127
        %p129 = pneg %p37
        %p130 = pneg %p34
        %p131 = pneg %p58
        %p132 = pneg %p55
        %p133 = pneg %p84
        %p134 = pneg %p81
        %s135 = sand.u32 %s71, 1
        %s136 = scalar_lea.sflag [#allocation3], %s135
        %s137 = sand.u32 %s71, 1
        %s138 = smul.addr %s137, 128
        %s139 = scalar_lea.vmem [#allocation2], %s138
        %s140 = smul.u32 4, %s16
        %p141 = scmp.lt.s32.totalorder %s140, 7
        %s142 = scalar_select %p141, %s140, 7
        %s143 = smul.addr %s142, 12
        %s144 = smul.addr %s143, 8
        %s145 = scalar_lea.vmem %s0, %s144
        %s146 = smul.u32 4, %s16
        %s147 = smul.u32 4, %s16
        %v149 = vld [vmem:[%s145] sm:$0xff]
        %v150 = vld [vmem:[%s145 + $0x8] sm:$0xff]
        %v151 = vld [vmem:[%s145 + $0x10] sm:$0xff]
        %v152 = vld [vmem:[%s145 + $0x18] sm:$0xff]
        %v153 = vld [vmem:[%s145 + $0x20] sm:$0xff]
        %v154 = vld [vmem:[%s145 + $0x28] sm:$0xff]
        %v155 = vld [vmem:[%s145 + $0x30] sm:$0xff]
        %v156 = vld [vmem:[%s145 + $0x38] sm:$0xff]
        %v157 = vld [vmem:[%s145 + $0x40] sm:$0xff]
        %v158 = vld [vmem:[%s145 + $0x48] sm:$0xff]
        %v159 = vld [vmem:[%s145 + $0x50] sm:$0xff]
        %v160 = vld [vmem:[%s145 + $0x58] sm:$0xff]
        %v161 = vld [vmem:[%s145 + $0x60] sm:$0xff]
        %v162 = vld [vmem:[%s145 + $0x68] sm:$0xff]
        %v163 = vld [vmem:[%s145 + $0x70] sm:$0xff]
        %v164 = vld [vmem:[%s145 + $0x78] sm:$0xff]
        %v165 = vld [vmem:[%s145 + $0x80] sm:$0xff]
        %v166 = vld [vmem:[%s145 + $0x88] sm:$0xff]
        %v167 = vld [vmem:[%s145 + $0x90] sm:$0xff]
        %v168 = vld [vmem:[%s145 + $0x98] sm:$0xff]
        %v169 = vld [vmem:[%s145 + $0xa0] sm:$0xff]
        %v170 = vld [vmem:[%s145 + $0xa8] sm:$0xff]
        %v171 = vld [vmem:[%s145 + $0xb0] sm:$0xff]
        %v172 = vld [vmem:[%s145 + $0xb8] sm:$0xff]
        %v173 = vld [vmem:[%s145 + $0xc0] sm:$0xff]
        %v174 = vld [vmem:[%s145 + $0xc8] sm:$0xff]
        %v175 = vld [vmem:[%s145 + $0xd0] sm:$0xff]
        %v176 = vld [vmem:[%s145 + $0xd8] sm:$0xff]
        %v177 = vld [vmem:[%s145 + $0xe0] sm:$0xff]
        %v178 = vld [vmem:[%s145 + $0xe8] sm:$0xff]
        %v179 = vld [vmem:[%s145 + $0xf0] sm:$0xff]
        %v180 = vld [vmem:[%s145 + $0xf8] sm:$0xff]
        %v181 = vld [vmem:[%s145 + $0x100] sm:$0xff]
        %v182 = vld [vmem:[%s145 + $0x108] sm:$0xff]
        %v183 = vld [vmem:[%s145 + $0x110] sm:$0xff]
        %v184 = vld [vmem:[%s145 + $0x118] sm:$0xff]
        %v185 = vld [vmem:[%s145 + $0x120] sm:$0xff]
        %v186 = vld [vmem:[%s145 + $0x128] sm:$0xff]
        %v187 = vld [vmem:[%s145 + $0x130] sm:$0xff]
        %v188 = vld [vmem:[%s145 + $0x138] sm:$0xff]
        %v189 = vld [vmem:[%s145 + $0x140] sm:$0xff]
        %v190 = vld [vmem:[%s145 + $0x148] sm:$0xff]
        %v191 = vld [vmem:[%s145 + $0x150] sm:$0xff]
        %v192 = vld [vmem:[%s145 + $0x158] sm:$0xff]
        %v193 = vld [vmem:[%s145 + $0x160] sm:$0xff]
        %v194 = vld [vmem:[%s145 + $0x168] sm:$0xff]
        %v195 = vld [vmem:[%s145 + $0x170] sm:$0xff]
        %v196 = vld [vmem:[%s145 + $0x178] sm:$0xff]
        %v197 = vpack.c.bf16 %v152, %v149
        %v198 = vpack.c.bf16 %v153, %v150
        %v199 = vpack.c.bf16 %v154, %v151
        %v200 = vpack.c.bf16 %v158, %v155
        %v201 = vpack.c.bf16 %v159, %v156
        %v202 = vpack.c.bf16 %v160, %v157
        %v203 = vpack.c.bf16 %v164, %v161
        %v204 = vpack.c.bf16 %v165, %v162
        %v205 = vpack.c.bf16 %v166, %v163
        %v206 = vpack.c.bf16 %v170, %v167
        %v207 = vpack.c.bf16 %v171, %v168
        %v208 = vpack.c.bf16 %v172, %v169
        %v209 = vpack.c.bf16 %v176, %v173
        %v210 = vpack.c.bf16 %v177, %v174
        %v211 = vpack.c.bf16 %v178, %v175
        %v212 = vpack.c.bf16 %v182, %v179
        %v213 = vpack.c.bf16 %v183, %v180
        %v214 = vpack.c.bf16 %v184, %v181
        %v215 = vpack.c.bf16 %v188, %v185
        %v216 = vpack.c.bf16 %v189, %v186
        %v217 = vpack.c.bf16 %v190, %v187
        %v218 = vpack.c.bf16 %v194, %v191
        %v219 = vpack.c.bf16 %v195, %v192
        %v220 = vpack.c.bf16 %v196, %v193
        %v221 = vld [vmem:[%s1] sm:$0xff]
        %v222 = vld [vmem:[%s1 + $0x8] sm:$0xff]
        %v223 = vld [vmem:[%s1 + $0x10] sm:$0xff]
        %v224 = vld [vmem:[%s1 + $0x18] sm:$0xff]
        %v225 = vld [vmem:[%s1 + $0x20] sm:$0xff]
        %v226 = vld [vmem:[%s1 + $0x28] sm:$0xff]
        %v227 = vld [vmem:[%s1 + $0x30] sm:$0xff]
        %v228 = vld [vmem:[%s1 + $0x38] sm:$0xff]
        %v229 = vld [vmem:[%s1 + $0x40] sm:$0xff]
        %v230 = vld [vmem:[%s1 + $0x48] sm:$0xff]
        %v231 = vld [vmem:[%s1 + $0x50] sm:$0xff]
        %v232 = vld [vmem:[%s1 + $0x58] sm:$0xff]
        %v233 = vld [vmem:[%s1 + $0x60] sm:$0xff]
        %v234 = vld [vmem:[%s1 + $0x68] sm:$0xff]
        %v235 = vld [vmem:[%s1 + $0x70] sm:$0xff]
        %v236 = vld [vmem:[%s1 + $0x78] sm:$0xff]
        %v237 = vld [vmem:[%s1 + $0x80] sm:$0xff]
        %v238 = vld [vmem:[%s1 + $0x88] sm:$0xff]
        %v239 = vld [vmem:[%s1 + $0x90] sm:$0xff]
        %v240 = vld [vmem:[%s1 + $0x98] sm:$0xff]
        %v241 = vld [vmem:[%s1 + $0xa0] sm:$0xff]
        %v242 = vld [vmem:[%s1 + $0xa8] sm:$0xff]
        %v243 = vld [vmem:[%s1 + $0xb0] sm:$0xff]
        %v244 = vld [vmem:[%s1 + $0xb8] sm:$0xff]
        %v245 = vld [vmem:[%s1 + $0xc0] sm:$0xff]
        %v246 = vld [vmem:[%s1 + $0xc8] sm:$0xff]
        %v247 = vld [vmem:[%s1 + $0xd0] sm:$0xff]
        %v248 = vld [vmem:[%s1 + $0xd8] sm:$0xff]
        %v249 = vld [vmem:[%s1 + $0xe0] sm:$0xff]
        %v250 = vld [vmem:[%s1 + $0xe8] sm:$0xff]
        %v251 = vld [vmem:[%s1 + $0xf0] sm:$0xff]
        %v252 = vld [vmem:[%s1 + $0xf8] sm:$0xff]
        %v253 = vld [vmem:[%s1 + $0x100] sm:$0xff]
        %v254 = vld [vmem:[%s1 + $0x108] sm:$0xff]
        %v255 = vld [vmem:[%s1 + $0x110] sm:$0xff]
        %v256 = vld [vmem:[%s1 + $0x118] sm:$0xff]
        %v257 = vld [vmem:[%s1 + $0x120] sm:$0xff]
        %v258 = vld [vmem:[%s1 + $0x128] sm:$0xff]
        %v259 = vld [vmem:[%s1 + $0x130] sm:$0xff]
        %v260 = vld [vmem:[%s1 + $0x138] sm:$0xff]
        %v261 = vld [vmem:[%s1 + $0x140] sm:$0xff]
        %v262 = vld [vmem:[%s1 + $0x148] sm:$0xff]
        %v263 = vld [vmem:[%s1 + $0x150] sm:$0xff]
        %v264 = vld [vmem:[%s1 + $0x158] sm:$0xff]
        %v265 = vld [vmem:[%s1 + $0x160] sm:$0xff]
        %v266 = vld [vmem:[%s1 + $0x168] sm:$0xff]
        %v267 = vld [vmem:[%s1 + $0x170] sm:$0xff]
        %v268 = vld [vmem:[%s1 + $0x178] sm:$0xff]
        %v269 = vld [vmem:[%s1 + $0x180] sm:$0xff]
        %v270 = vld [vmem:[%s1 + $0x188] sm:$0xff]
        %v271 = vld [vmem:[%s1 + $0x190] sm:$0xff]
        %v272 = vld [vmem:[%s1 + $0x198] sm:$0xff]
        %v273 = vld [vmem:[%s1 + $0x1a0] sm:$0xff]
        %v274 = vld [vmem:[%s1 + $0x1a8] sm:$0xff]
        %v275 = vld [vmem:[%s1 + $0x1b0] sm:$0xff]
        %v276 = vld [vmem:[%s1 + $0x1b8] sm:$0xff]
        %v277 = vld [vmem:[%s1 + $0x1c0] sm:$0xff]
        %v278 = vld [vmem:[%s1 + $0x1c8] sm:$0xff]
        %v279 = vld [vmem:[%s1 + $0x1d0] sm:$0xff]
        %v280 = vld [vmem:[%s1 + $0x1d8] sm:$0xff]
        %v281 = vld [vmem:[%s1 + $0x1e0] sm:$0xff]
        %v282 = vld [vmem:[%s1 + $0x1e8] sm:$0xff]
        %v283 = vld [vmem:[%s1 + $0x1f0] sm:$0xff]
        %v284 = vld [vmem:[%s1 + $0x1f8] sm:$0xff]
        %v285 = vld [vmem:[%s1 + $0x200] sm:$0xff]
        %v286 = vld [vmem:[%s1 + $0x208] sm:$0xff]
        %v287 = vld [vmem:[%s1 + $0x210] sm:$0xff]
        %v288 = vld [vmem:[%s1 + $0x218] sm:$0xff]
        %v289 = vld [vmem:[%s1 + $0x220] sm:$0xff]
        %v290 = vld [vmem:[%s1 + $0x228] sm:$0xff]
        %v291 = vld [vmem:[%s1 + $0x230] sm:$0xff]
        %v292 = vld [vmem:[%s1 + $0x238] sm:$0xff]
        %v293 = vld [vmem:[%s1 + $0x240] sm:$0xff]
        %v294 = vld [vmem:[%s1 + $0x248] sm:$0xff]
        %v295 = vld [vmem:[%s1 + $0x250] sm:$0xff]
        %v296 = vld [vmem:[%s1 + $0x258] sm:$0xff]
        %v297 = vld [vmem:[%s1 + $0x260] sm:$0xff]
        %v298 = vld [vmem:[%s1 + $0x268] sm:$0xff]
        %v299 = vld [vmem:[%s1 + $0x270] sm:$0xff]
        %v300 = vld [vmem:[%s1 + $0x278] sm:$0xff]
        %v301 = vld [vmem:[%s1 + $0x280] sm:$0xff]
        %v302 = vld [vmem:[%s1 + $0x288] sm:$0xff]
        %v303 = vld [vmem:[%s1 + $0x290] sm:$0xff]
        %v304 = vld [vmem:[%s1 + $0x298] sm:$0xff]
        %v305 = vld [vmem:[%s1 + $0x2a0] sm:$0xff]
        %v306 = vld [vmem:[%s1 + $0x2a8] sm:$0xff]
        %v307 = vld [vmem:[%s1 + $0x2b0] sm:$0xff]
        %v308 = vld [vmem:[%s1 + $0x2b8] sm:$0xff]
        %v309 = vld [vmem:[%s1 + $0x2c0] sm:$0xff]
        %v310 = vld [vmem:[%s1 + $0x2c8] sm:$0xff]
        %v311 = vld [vmem:[%s1 + $0x2d0] sm:$0xff]
        %v312 = vld [vmem:[%s1 + $0x2d8] sm:$0xff]
        %v313 = vld [vmem:[%s1 + $0x2e0] sm:$0xff]
        %v314 = vld [vmem:[%s1 + $0x2e8] sm:$0xff]
        %v315 = vld [vmem:[%s1 + $0x2f0] sm:$0xff]
        %v316 = vld [vmem:[%s1 + $0x2f8] sm:$0xff]
        %v317 = vpack.c.bf16 %v223, %v221
        %v318 = vpack.c.bf16 %v224, %v222
        %v319 = vpack.c.bf16 %v227, %v225
        %v320 = vpack.c.bf16 %v228, %v226
        %v321 = vpack.c.bf16 %v231, %v229
        %v322 = vpack.c.bf16 %v232, %v230
        %v323 = vpack.c.bf16 %v235, %v233
        %v324 = vpack.c.bf16 %v236, %v234
        %v325 = vpack.c.bf16 %v239, %v237
        %v326 = vpack.c.bf16 %v240, %v238
        %v327 = vpack.c.bf16 %v243, %v241
        %v328 = vpack.c.bf16 %v244, %v242
        %v329 = vpack.c.bf16 %v247, %v245
        %v330 = vpack.c.bf16 %v248, %v246
        %v331 = vpack.c.bf16 %v251, %v249
        %v332 = vpack.c.bf16 %v252, %v250
        %v333 = vpack.c.bf16 %v255, %v253
        %v334 = vpack.c.bf16 %v256, %v254
        %v335 = vpack.c.bf16 %v259, %v257
        %v336 = vpack.c.bf16 %v260, %v258
        %v337 = vpack.c.bf16 %v263, %v261
        %v338 = vpack.c.bf16 %v264, %v262
        %v339 = vpack.c.bf16 %v267, %v265
        %v340 = vpack.c.bf16 %v268, %v266
        %v341 = vpack.c.bf16 %v271, %v269
        %v342 = vpack.c.bf16 %v272, %v270
        %v343 = vpack.c.bf16 %v275, %v273
        %v344 = vpack.c.bf16 %v276, %v274
        %v345 = vpack.c.bf16 %v279, %v277
        %v346 = vpack.c.bf16 %v280, %v278
        %v347 = vpack.c.bf16 %v283, %v281
        %v348 = vpack.c.bf16 %v284, %v282
        %v349 = vpack.c.bf16 %v287, %v285
        %v350 = vpack.c.bf16 %v288, %v286
        %v351 = vpack.c.bf16 %v291, %v289
        %v352 = vpack.c.bf16 %v292, %v290
        %v353 = vpack.c.bf16 %v295, %v293
        %v354 = vpack.c.bf16 %v296, %v294
        %v355 = vpack.c.bf16 %v299, %v297
        %v356 = vpack.c.bf16 %v300, %v298
        %v357 = vpack.c.bf16 %v303, %v301
        %v358 = vpack.c.bf16 %v304, %v302
        %v359 = vpack.c.bf16 %v307, %v305
        %v360 = vpack.c.bf16 %v308, %v306
        %v361 = vpack.c.bf16 %v311, %v309
        %v362 = vpack.c.bf16 %v312, %v310
        %v363 = vpack.c.bf16 %v315, %v313
        %v364 = vpack.c.bf16 %v316, %v314
        %365 = vmatpush.bf16.msra.mxu0 %v331
        %366 = vmatpush.bf16.msra.mxu0 %v329
        %367 = vmatpush.bf16.msra.mxu0 %v327
        %368 = vmatpush.bf16.msra.mxu0 %v325
        %369 = vmatpush.bf16.msra.mxu0 %v323
        %370 = vmatpush.bf16.msra.mxu0 %v321
        %371 = vmatpush.bf16.msra.mxu0 %v319
        %372 = vmatpush.bf16.msra.mxu0 %v317
        %373 = vmatmul.bf16.gmra.mxu0 %v197
        %v374 = vpop.f32.mrf.mxu0
        %v375 = vadd.f32 0.0, %v374
        %v376 = vpop.f32.mrf.mxu0
        %v377 = vadd.f32 0.0, %v376
        %378 = vmatmul.bf16.gmra.mxu0 %v200
        %v379 = vpop.f32.mrf.mxu0
        %v380 = vadd.f32 0.0, %v379
        %v381 = vpop.f32.mrf.mxu0
        %v382 = vadd.f32 0.0, %v381
        %383 = vmatmul.bf16.gmra.mxu0 %v203
        %v384 = vpop.f32.mrf.mxu0
        %v385 = vadd.f32 0.0, %v384
        %v386 = vpop.f32.mrf.mxu0
        %v387 = vadd.f32 0.0, %v386
        %388 = vmatmul.bf16.gmra.mxu0 %v206
        %v389 = vpop.f32.mrf.mxu0
        %v390 = vadd.f32 0.0, %v389
        %v391 = vpop.f32.mrf.mxu0
        %v392 = vadd.f32 0.0, %v391
        %393 = vmatmul.bf16.gmra.mxu0 %v209
        %v394 = vpop.f32.mrf.mxu0
        %v395 = vadd.f32 0.0, %v394
        %v396 = vpop.f32.mrf.mxu0
        %v397 = vadd.f32 0.0, %v396
        %398 = vmatmul.bf16.gmra.mxu0 %v212
        %v399 = vpop.f32.mrf.mxu0
        %v400 = vadd.f32 0.0, %v399
        %v401 = vpop.f32.mrf.mxu0
        %v402 = vadd.f32 0.0, %v401
        %403 = vmatmul.bf16.gmra.mxu0 %v215
        %v404 = vpop.f32.mrf.mxu0
        %v405 = vadd.f32 0.0, %v404
        %v406 = vpop.f32.mrf.mxu0
        %v407 = vadd.f32 0.0, %v406
        %408 = vmatmul.bf16.gmra.mxu0 %v218
        %v409 = vpop.f32.mrf.mxu0
        %v410 = vadd.f32 0.0, %v409
        %v411 = vpop.f32.mrf.mxu0
        %v412 = vadd.f32 0.0, %v411
        %413 = vdwg.mxu0
        %414 = vmatpush.bf16.msra.mxu0 %v347
        %415 = vmatpush.bf16.msra.mxu0 %v345
        %416 = vmatpush.bf16.msra.mxu0 %v343
        %417 = vmatpush.bf16.msra.mxu0 %v341
        %418 = vmatpush.bf16.msra.mxu0 %v339
        %419 = vmatpush.bf16.msra.mxu0 %v337
        %420 = vmatpush.bf16.msra.mxu0 %v335
        %421 = vmatpush.bf16.msra.mxu0 %v333
        %422 = vmatmul.bf16.gmra.mxu0 %v198
        %v423 = vpop.f32.mrf.mxu0
        %v424 = vadd.f32 %v375, %v423
        %v425 = vpop.f32.mrf.mxu0
        %v426 = vadd.f32 %v377, %v425
        %427 = vmatmul.bf16.gmra.mxu0 %v201
        %v428 = vpop.f32.mrf.mxu0
        %v429 = vadd.f32 %v380, %v428
        %v430 = vpop.f32.mrf.mxu0
        %v431 = vadd.f32 %v382, %v430
        %432 = vmatmul.bf16.gmra.mxu0 %v204
        %v433 = vpop.f32.mrf.mxu0
        %v434 = vadd.f32 %v385, %v433
        %v435 = vpop.f32.mrf.mxu0
        %v436 = vadd.f32 %v387, %v435
        %437 = vmatmul.bf16.gmra.mxu0 %v207
        %v438 = vpop.f32.mrf.mxu0
        %v439 = vadd.f32 %v390, %v438
        %v440 = vpop.f32.mrf.mxu0
        %v441 = vadd.f32 %v392, %v440
        %442 = vmatmul.bf16.gmra.mxu0 %v210
        %v443 = vpop.f32.mrf.mxu0
        %v444 = vadd.f32 %v395, %v443
        %v445 = vpop.f32.mrf.mxu0
        %v446 = vadd.f32 %v397, %v445
        %447 = vmatmul.bf16.gmra.mxu0 %v213
        %v448 = vpop.f32.mrf.mxu0
        %v449 = vadd.f32 %v400, %v448
        %v450 = vpop.f32.mrf.mxu0
        %v451 = vadd.f32 %v402, %v450
        %452 = vmatmul.bf16.gmra.mxu0 %v216
        %v453 = vpop.f32.mrf.mxu0
        %v454 = vadd.f32 %v405, %v453
        %v455 = vpop.f32.mrf.mxu0
        %v456 = vadd.f32 %v407, %v455
        %457 = vmatmul.bf16.gmra.mxu0 %v219
        %v458 = vpop.f32.mrf.mxu0
        %v459 = vadd.f32 %v410, %v458
        %v460 = vpop.f32.mrf.mxu0
        %v461 = vadd.f32 %v412, %v460
        %462 = vdwg.mxu0
        %463 = vmatpush.bf16.msra.mxu0 %v363
        %464 = vmatpush.bf16.msra.mxu0 %v361
        %465 = vmatpush.bf16.msra.mxu0 %v359
        %466 = vmatpush.bf16.msra.mxu0 %v357
        %467 = vmatpush.bf16.msra.mxu0 %v355
        %468 = vmatpush.bf16.msra.mxu0 %v353
        %469 = vmatpush.bf16.msra.mxu0 %v351
        %470 = vmatpush.bf16.msra.mxu0 %v349
        %471 = vmatmul.bf16.gmra.mxu0 %v199
        %v472 = vpop.f32.mrf.mxu0
        %v473 = vadd.f32 %v424, %v472
        %v474 = vpop.f32.mrf.mxu0
        %v475 = vadd.f32 %v426, %v474
        %476 = vmatmul.bf16.gmra.mxu0 %v202
        %v477 = vpop.f32.mrf.mxu0
        %v478 = vadd.f32 %v429, %v477
        %v479 = vpop.f32.mrf.mxu0
        %v480 = vadd.f32 %v431, %v479
        %481 = vmatmul.bf16.gmra.mxu0 %v205
        %v482 = vpop.f32.mrf.mxu0
        %v483 = vadd.f32 %v434, %v482
        %v484 = vpop.f32.mrf.mxu0
        %v485 = vadd.f32 %v436, %v484
        %486 = vmatmul.bf16.gmra.mxu0 %v208
        %v487 = vpop.f32.mrf.mxu0
        %v488 = vadd.f32 %v439, %v487
        %v489 = vpop.f32.mrf.mxu0
        %v490 = vadd.f32 %v441, %v489
        %491 = vmatmul.bf16.gmra.mxu0 %v211
        %v492 = vpop.f32.mrf.mxu0
        %v493 = vadd.f32 %v444, %v492
        %v494 = vpop.f32.mrf.mxu0
        %v495 = vadd.f32 %v446, %v494
        %496 = vmatmul.bf16.gmra.mxu0 %v214
        %v497 = vpop.f32.mrf.mxu0
        %v498 = vadd.f32 %v449, %v497
        %v499 = vpop.f32.mrf.mxu0
        %v500 = vadd.f32 %v451, %v499
        %501 = vmatmul.bf16.gmra.mxu0 %v217
        %v502 = vpop.f32.mrf.mxu0
        %v503 = vadd.f32 %v454, %v502
        %v504 = vpop.f32.mrf.mxu0
        %v505 = vadd.f32 %v456, %v504
        %506 = vmatmul.bf16.gmra.mxu0 %v220
        %v507 = vpop.f32.mrf.mxu0
        %v508 = vadd.f32 %v459, %v507
        %v509 = vpop.f32.mrf.mxu0
        %v510 = vadd.f32 %v461, %v509
        %511 = vdwg.mxu0
        %512 = vmatpush.bf16.msra.mxu0 %v332
        %513 = vmatpush.bf16.msra.mxu0 %v330
        %514 = vmatpush.bf16.msra.mxu0 %v328
        %515 = vmatpush.bf16.msra.mxu0 %v326
        %516 = vmatpush.bf16.msra.mxu0 %v324
        %517 = vmatpush.bf16.msra.mxu0 %v322
        %518 = vmatpush.bf16.msra.mxu0 %v320
        %519 = vmatpush.bf16.msra.mxu0 %v318
        %520 = vmatmul.bf16.gmra.mxu0 %v197
        %v521 = vpop.f32.mrf.mxu0
        %v522 = vadd.f32 0.0, %v521
        %v523 = vpop.f32.mrf.mxu0
        %v524 = vadd.f32 0.0, %v523
        %525 = vmatmul.bf16.gmra.mxu0 %v200
        %v526 = vpop.f32.mrf.mxu0
        %v527 = vadd.f32 0.0, %v526
        %v528 = vpop.f32.mrf.mxu0
        %v529 = vadd.f32 0.0, %v528
        %530 = vmatmul.bf16.gmra.mxu0 %v203
        %v531 = vpop.f32.mrf.mxu0
        %v532 = vadd.f32 0.0, %v531
        %v533 = vpop.f32.mrf.mxu0
        %v534 = vadd.f32 0.0, %v533
        %535 = vmatmul.bf16.gmra.mxu0 %v206
        %v536 = vpop.f32.mrf.mxu0
        %v537 = vadd.f32 0.0, %v536
        %v538 = vpop.f32.mrf.mxu0
        %v539 = vadd.f32 0.0, %v538
        %540 = vmatmul.bf16.gmra.mxu0 %v209
        %v541 = vpop.f32.mrf.mxu0
        %v542 = vadd.f32 0.0, %v541
        %v543 = vpop.f32.mrf.mxu0
        %v544 = vadd.f32 0.0, %v543
        %545 = vmatmul.bf16.gmra.mxu0 %v212
        %v546 = vpop.f32.mrf.mxu0
        %v547 = vadd.f32 0.0, %v546
        %v548 = vpop.f32.mrf.mxu0
        %v549 = vadd.f32 0.0, %v548
        %550 = vmatmul.bf16.gmra.mxu0 %v215
        %v551 = vpop.f32.mrf.mxu0
        %v552 = vadd.f32 0.0, %v551
        %v553 = vpop.f32.mrf.mxu0
        %v554 = vadd.f32 0.0, %v553
        %555 = vmatmul.bf16.gmra.mxu0 %v218
        %v556 = vpop.f32.mrf.mxu0
        %v557 = vadd.f32 0.0, %v556
        %v558 = vpop.f32.mrf.mxu0
        %v559 = vadd.f32 0.0, %v558
        %560 = vdwg.mxu0
        %561 = vmatpush.bf16.msra.mxu0 %v348
        %562 = vmatpush.bf16.msra.mxu0 %v346
        %563 = vmatpush.bf16.msra.mxu0 %v344
        %564 = vmatpush.bf16.msra.mxu0 %v342
        %565 = vmatpush.bf16.msra.mxu0 %v340
        %566 = vmatpush.bf16.msra.mxu0 %v338
        %567 = vmatpush.bf16.msra.mxu0 %v336
        %568 = vmatpush.bf16.msra.mxu0 %v334
        %569 = vmatmul.bf16.gmra.mxu0 %v198
        %v570 = vpop.f32.mrf.mxu0
        %v571 = vadd.f32 %v522, %v570
        %v572 = vpop.f32.mrf.mxu0
        %v573 = vadd.f32 %v524, %v572
        %574 = vmatmul.bf16.gmra.mxu0 %v201
        %v575 = vpop.f32.mrf.mxu0
        %v576 = vadd.f32 %v527, %v575
        %v577 = vpop.f32.mrf.mxu0
        %v578 = vadd.f32 %v529, %v577
        %579 = vmatmul.bf16.gmra.mxu0 %v204
        %v580 = vpop.f32.mrf.mxu0
        %v581 = vadd.f32 %v532, %v580
        %v582 = vpop.f32.mrf.mxu0
        %v583 = vadd.f32 %v534, %v582
        %584 = vmatmul.bf16.gmra.mxu0 %v207
        %v585 = vpop.f32.mrf.mxu0
        %v586 = vadd.f32 %v537, %v585
        %v587 = vpop.f32.mrf.mxu0
        %v588 = vadd.f32 %v539, %v587
        %589 = vmatmul.bf16.gmra.mxu0 %v210
        %v590 = vpop.f32.mrf.mxu0
        %v591 = vadd.f32 %v542, %v590
        %v592 = vpop.f32.mrf.mxu0
        %v593 = vadd.f32 %v544, %v592
        %594 = vmatmul.bf16.gmra.mxu0 %v213
        %v595 = vpop.f32.mrf.mxu0
        %v596 = vadd.f32 %v547, %v595
        %v597 = vpop.f32.mrf.mxu0
        %v598 = vadd.f32 %v549, %v597
        %599 = vmatmul.bf16.gmra.mxu0 %v216
        %v600 = vpop.f32.mrf.mxu0
        %v601 = vadd.f32 %v552, %v600
        %v602 = vpop.f32.mrf.mxu0
        %v603 = vadd.f32 %v554, %v602
        %604 = vmatmul.bf16.gmra.mxu0 %v219
        %v605 = vpop.f32.mrf.mxu0
        %v606 = vadd.f32 %v557, %v605
        %v607 = vpop.f32.mrf.mxu0
        %v608 = vadd.f32 %v559, %v607
        %609 = vdwg.mxu0
        %610 = vmatpush.bf16.msra.mxu0 %v364
        %611 = vmatpush.bf16.msra.mxu0 %v362
        %612 = vmatpush.bf16.msra.mxu0 %v360
        %613 = vmatpush.bf16.msra.mxu0 %v358
        %614 = vmatpush.bf16.msra.mxu0 %v356
        %615 = vmatpush.bf16.msra.mxu0 %v354
        %616 = vmatpush.bf16.msra.mxu0 %v352
        %617 = vmatpush.bf16.msra.mxu0 %v350
        %618 = vmatmul.bf16.gmra.mxu0 %v199
        %v619 = vpop.f32.mrf.mxu0
        %v620 = vadd.f32 %v571, %v619
        %v621 = vpop.f32.mrf.mxu0
        %v622 = vadd.f32 %v573, %v621
        %623 = vmatmul.bf16.gmra.mxu0 %v202
        %v624 = vpop.f32.mrf.mxu0
        %v625 = vadd.f32 %v576, %v624
        %v626 = vpop.f32.mrf.mxu0
        %v627 = vadd.f32 %v578, %v626
        %628 = vmatmul.bf16.gmra.mxu0 %v205
        %v629 = vpop.f32.mrf.mxu0
        %v630 = vadd.f32 %v581, %v629
        %v631 = vpop.f32.mrf.mxu0
        %v632 = vadd.f32 %v583, %v631
        %633 = vmatmul.bf16.gmra.mxu0 %v208
        %v634 = vpop.f32.mrf.mxu0
        %v635 = vadd.f32 %v586, %v634
        %v636 = vpop.f32.mrf.mxu0
        %v637 = vadd.f32 %v588, %v636
        %638 = vmatmul.bf16.gmra.mxu0 %v211
        %v639 = vpop.f32.mrf.mxu0
        %v640 = vadd.f32 %v591, %v639
        %v641 = vpop.f32.mrf.mxu0
        %v642 = vadd.f32 %v593, %v641
        %643 = vmatmul.bf16.gmra.mxu0 %v214
        %v644 = vpop.f32.mrf.mxu0
        %v645 = vadd.f32 %v596, %v644
        %v646 = vpop.f32.mrf.mxu0
        %v647 = vadd.f32 %v598, %v646
        %648 = vmatmul.bf16.gmra.mxu0 %v217
        %v649 = vpop.f32.mrf.mxu0
        %v650 = vadd.f32 %v601, %v649
        %v651 = vpop.f32.mrf.mxu0
        %v652 = vadd.f32 %v603, %v651
        %653 = vmatmul.bf16.gmra.mxu0 %v220
        %v654 = vpop.f32.mrf.mxu0
        %v655 = vadd.f32 %v606, %v654
        %v656 = vpop.f32.mrf.mxu0
        %v657 = vadd.f32 %v608, %v656
        %658 = vdwg.mxu0
        %v659 = vmul.f32 %v473, 0.05103104
        %v660 = vmul.f32 %v475, 0.05103104
        %v661 = vmul.f32 %v478, 0.05103104
        %v662 = vmul.f32 %v480, 0.05103104
        %v663 = vmul.f32 %v483, 0.05103104
        %v664 = vmul.f32 %v485, 0.05103104
        %v665 = vmul.f32 %v488, 0.05103104
        %v666 = vmul.f32 %v490, 0.05103104
        %v667 = vmul.f32 %v493, 0.05103104
        %v668 = vmul.f32 %v495, 0.05103104
        %v669 = vmul.f32 %v498, 0.05103104
        %v670 = vmul.f32 %v500, 0.05103104
        %v671 = vmul.f32 %v503, 0.05103104
        %v672 = vmul.f32 %v505, 0.05103104
        %v673 = vmul.f32 %v508, 0.05103104
        %v674 = vmul.f32 %v510, 0.05103104
        %v675 = vpack.c.bf16 %v659, %v659
        %v676 = vpack.c.bf16 %v660, %v660
        %v677 = vpack.c.bf16 %v661, %v661
        %v678 = vpack.c.bf16 %v662, %v662
        %v679 = vpack.c.bf16 %v663, %v663
        %v680 = vpack.c.bf16 %v664, %v664
        %v681 = vpack.c.bf16 %v665, %v665
        %v682 = vpack.c.bf16 %v666, %v666
        %v683 = vpack.c.bf16 %v667, %v667
        %v684 = vpack.c.bf16 %v668, %v668
        %v685 = vpack.c.bf16 %v669, %v669
        %v686 = vpack.c.bf16 %v670, %v670
        %v687 = vpack.c.bf16 %v671, %v671
        %v688 = vpack.c.bf16 %v672, %v672
        %v689 = vpack.c.bf16 %v673, %v673
        %v690 = vpack.c.bf16 %v674, %v674
        %v691 = vpack.c.bf16 %v473, %v473
        %v692 = vpack.c.bf16 %v475, %v475
        %v693 = vpack.c.bf16 %v478, %v478
        %v694 = vpack.c.bf16 %v480, %v480
        %v695 = vpack.c.bf16 %v483, %v483
        %v696 = vpack.c.bf16 %v485, %v485
        %v697 = vpack.c.bf16 %v488, %v488
        %v698 = vpack.c.bf16 %v490, %v490
        %v699 = vpack.c.bf16 %v493, %v493
        %v700 = vpack.c.bf16 %v495, %v495
        %v701 = vpack.c.bf16 %v498, %v498
        %v702 = vpack.c.bf16 %v500, %v500
        %v703 = vpack.c.bf16 %v503, %v503
        %v704 = vpack.c.bf16 %v505, %v505
        %v705 = vpack.c.bf16 %v508, %v508
        %v706 = vpack.c.bf16 %v510, %v510
        %v707 = vpack.c.bf16 %v620, %v620
        %v708 = vpack.c.bf16 %v622, %v622
        %v709 = vpack.c.bf16 %v625, %v625
        %v710 = vpack.c.bf16 %v627, %v627
        %v711 = vpack.c.bf16 %v630, %v630
        %v712 = vpack.c.bf16 %v632, %v632
        %v713 = vpack.c.bf16 %v635, %v635
        %v714 = vpack.c.bf16 %v637, %v637
        %v715 = vpack.c.bf16 %v640, %v640
        %v716 = vpack.c.bf16 %v642, %v642
        %v717 = vpack.c.bf16 %v645, %v645
        %v718 = vpack.c.bf16 %v647, %v647
        %v719 = vpack.c.bf16 %v650, %v650
        %v720 = vpack.c.bf16 %v652, %v652
        %v721 = vpack.c.bf16 %v655, %v655
        %v722 = vpack.c.bf16 %v657, %v657
        %v727 = vunpack.c.l.b16 %v675
        %v728 = vunpack.c.l.b16 %v676
        %v729 = vunpack.c.l.b16 %v677
        %v730 = vunpack.c.l.b16 %v678
        %v731 = vpack.c.b16 %v728, %v727
        %v732 = vpack.c.b16 %v730, %v729
        %v737 = vunpack.c.l.b16 %v691
        %v738 = vunpack.c.l.b16 %v692
        %v739 = vunpack.c.l.b16 %v693
        %v740 = vunpack.c.l.b16 %v694
        %v741 = vpack.c.b16 %v738, %v737
        %v742 = vpack.c.b16 %v740, %v739
        %743 = vrot.lane.b32.xlu0 %v741, 64
        %v744 = vpop.permute.xlu0 %743
        %745 = vrot.lane.b32.xlu0 %v742, 64
        %v746 = vpop.permute.xlu0 %745
        %vm747 = vcmask 523264
        %v749 = vsel %vm747, %v731, 0
        %v752 = vsel %vm747, %v732, 0
        %v755 = vsel %vm747, %v744, 0
        %v758 = vsel %vm747, %v746, 0
        %760 = vmatpush.bf16.xpose.msra.mxu0 0
        %761 = vmatpush.bf16.xpose.msra.mxu0 0
        %762 = vmatpush.bf16.xpose.msra.mxu0 0
        %763 = vmatpush.bf16.xpose.msra.mxu0 0
        %764 = vmatpush.bf16.xpose.msra.mxu0 0
        %765 = vmatpush.bf16.xpose.msra.mxu0 0
        %766 = vmatpush.bf16.xpose.msra.mxu0 %v758
        %767 = vmatpush.bf16.xpose.msra.mxu0 %v755
        %768 = vmatmul.bf16.gmra.mxu0 %v749
        %v769 = vpop.f32.mrf.mxu0
        %v770 = vadd.f32 0.0, %v769
        %v771 = vpop.f32.mrf.mxu0
        %v772 = vadd.f32 0.0, %v771
        %773 = vmatmul.bf16.gmra.mxu0 %v752
        %v774 = vpop.f32.mrf.mxu0
        %v775 = vadd.f32 0.0, %v774
        %v776 = vpop.f32.mrf.mxu0
        %v777 = vadd.f32 0.0, %v776
        %778 = vdwg.mxu0
        %v783 = vunpack.c.l.b16 %v679
        %v784 = vunpack.c.l.b16 %v680
        %v785 = vunpack.c.l.b16 %v681
        %v786 = vunpack.c.l.b16 %v682
        %v787 = vpack.c.b16 %v784, %v783
        %v788 = vpack.c.b16 %v786, %v785
        %v793 = vunpack.c.l.b16 %v695
        %v794 = vunpack.c.l.b16 %v696
        %v795 = vunpack.c.l.b16 %v697
        %v796 = vunpack.c.l.b16 %v698
        %v797 = vpack.c.b16 %v794, %v793
        %v798 = vpack.c.b16 %v796, %v795
        %799 = vrot.lane.b32.xlu0 %v797, 64
        %v800 = vpop.permute.xlu0 %799
        %801 = vrot.lane.b32.xlu0 %v798, 64
        %v802 = vpop.permute.xlu0 %801
        %v804 = vsel %vm747, %v787, 0
        %v807 = vsel %vm747, %v788, 0
        %v810 = vsel %vm747, %v800, 0
        %v813 = vsel %vm747, %v802, 0
        %815 = vmatpush.bf16.xpose.msra.mxu0 0
        %816 = vmatpush.bf16.xpose.msra.mxu0 0
        %817 = vmatpush.bf16.xpose.msra.mxu0 0
        %818 = vmatpush.bf16.xpose.msra.mxu0 0
        %819 = vmatpush.bf16.xpose.msra.mxu0 0
        %820 = vmatpush.bf16.xpose.msra.mxu0 0
        %821 = vmatpush.bf16.xpose.msra.mxu0 %v813
        %822 = vmatpush.bf16.xpose.msra.mxu0 %v810
        %823 = vmatmul.bf16.gmra.mxu0 %v804
        %v824 = vpop.f32.mrf.mxu0
        %v825 = vadd.f32 0.0, %v824
        %v826 = vpop.f32.mrf.mxu0
        %v827 = vadd.f32 0.0, %v826
        %828 = vmatmul.bf16.gmra.mxu0 %v807
        %v829 = vpop.f32.mrf.mxu0
        %v830 = vadd.f32 0.0, %v829
        %v831 = vpop.f32.mrf.mxu0
        %v832 = vadd.f32 0.0, %v831
        %833 = vdwg.mxu0
        %v838 = vunpack.c.l.b16 %v683
        %v839 = vunpack.c.l.b16 %v684
        %v840 = vunpack.c.l.b16 %v685
        %v841 = vunpack.c.l.b16 %v686
        %v842 = vpack.c.b16 %v839, %v838
        %v843 = vpack.c.b16 %v841, %v840
        %v848 = vunpack.c.l.b16 %v699
        %v849 = vunpack.c.l.b16 %v700
        %v850 = vunpack.c.l.b16 %v701
        %v851 = vunpack.c.l.b16 %v702
        %v852 = vpack.c.b16 %v849, %v848
        %v853 = vpack.c.b16 %v851, %v850
        %854 = vrot.lane.b32.xlu0 %v852, 64
        %v855 = vpop.permute.xlu0 %854
        %856 = vrot.lane.b32.xlu0 %v853, 64
        %v857 = vpop.permute.xlu0 %856
        %v859 = vsel %vm747, %v842, 0
        %v862 = vsel %vm747, %v843, 0
        %v865 = vsel %vm747, %v855, 0
        %v868 = vsel %vm747, %v857, 0
        %870 = vmatpush.bf16.xpose.msra.mxu0 0
        %871 = vmatpush.bf16.xpose.msra.mxu0 0
        %872 = vmatpush.bf16.xpose.msra.mxu0 0
        %873 = vmatpush.bf16.xpose.msra.mxu0 0
        %874 = vmatpush.bf16.xpose.msra.mxu0 0
        %875 = vmatpush.bf16.xpose.msra.mxu0 0
        %876 = vmatpush.bf16.xpose.msra.mxu0 %v868
        %877 = vmatpush.bf16.xpose.msra.mxu0 %v865
        %878 = vmatmul.bf16.gmra.mxu0 %v859
        %v879 = vpop.f32.mrf.mxu0
        %v880 = vadd.f32 0.0, %v879
        %v881 = vpop.f32.mrf.mxu0
        %v882 = vadd.f32 0.0, %v881
        %883 = vmatmul.bf16.gmra.mxu0 %v862
        %v884 = vpop.f32.mrf.mxu0
        %v885 = vadd.f32 0.0, %v884
        %v886 = vpop.f32.mrf.mxu0
        %v887 = vadd.f32 0.0, %v886
        %888 = vdwg.mxu0
        %v893 = vunpack.c.l.b16 %v687
        %v894 = vunpack.c.l.b16 %v688
        %v895 = vunpack.c.l.b16 %v689
        %v896 = vunpack.c.l.b16 %v690
        %v897 = vpack.c.b16 %v894, %v893
        %v898 = vpack.c.b16 %v896, %v895
        %v903 = vunpack.c.l.b16 %v703
        %v904 = vunpack.c.l.b16 %v704
        %v905 = vunpack.c.l.b16 %v705
        %v906 = vunpack.c.l.b16 %v706
        %v907 = vpack.c.b16 %v904, %v903
        %v908 = vpack.c.b16 %v906, %v905
        %909 = vrot.lane.b32.xlu0 %v907, 64
        %v910 = vpop.permute.xlu0 %909
        %911 = vrot.lane.b32.xlu0 %v908, 64
        %v912 = vpop.permute.xlu0 %911
        %v914 = vsel %vm747, %v897, 0
        %v917 = vsel %vm747, %v898, 0
        %v920 = vsel %vm747, %v910, 0
        %v923 = vsel %vm747, %v912, 0
        %925 = vmatpush.bf16.xpose.msra.mxu0 0
        %926 = vmatpush.bf16.xpose.msra.mxu0 0
        %927 = vmatpush.bf16.xpose.msra.mxu0 0
        %928 = vmatpush.bf16.xpose.msra.mxu0 0
        %929 = vmatpush.bf16.xpose.msra.mxu0 0
        %930 = vmatpush.bf16.xpose.msra.mxu0 0
        %931 = vmatpush.bf16.xpose.msra.mxu0 %v923
        %932 = vmatpush.bf16.xpose.msra.mxu0 %v920
        %933 = vmatmul.bf16.gmra.mxu0 %v914
        %v934 = vpop.f32.mrf.mxu0
        %v935 = vadd.f32 0.0, %v934
        %v936 = vpop.f32.mrf.mxu0
        %v937 = vadd.f32 0.0, %v936
        %938 = vmatmul.bf16.gmra.mxu0 %v917
        %v939 = vpop.f32.mrf.mxu0
        %v940 = vadd.f32 0.0, %v939
        %v941 = vpop.f32.mrf.mxu0
        %v942 = vadd.f32 0.0, %v941
        %943 = vdwg.mxu0
        %v944 = vlaneseq
        %v945 = vshrl.u32 %v944, 7
        %v946 = vadd.s32 %v945, 8
        %v947 = vadd.s32 %v945, 16
        %v948 = vadd.s32 %v945, 24
        %v949 = vlaneseq
        %v950 = vand.u32 %v949, 127
        %vm951 = vcmp.le.s32.totalorder %v950, %v945
        %vm952 = vcmp.le.s32.totalorder %v950, %v946
        %vm953 = vcmp.le.s32.totalorder %v950, %v947
        %vm954 = vcmp.le.s32.totalorder %v950, %v948
        %v955 = vsel %vm951, 1, 0
        %v956 = vsel %vm952, 1, 0
        %v957 = vsel %vm953, 1, 0
        %v958 = vsel %vm954, 1, 0
        %vm959 = vcmp.eq.s32.totalorder %v955, 1
        %vm960 = vcmp.eq.s32.totalorder %v956, 1
        %vm961 = vcmp.eq.s32.totalorder %v957, 1
        %vm962 = vcmp.eq.s32.totalorder %v958, 1
        %v963 = vsel %vm959, %v770, -1e+30
        %v964 = vsel %vm960, %v772, -1e+30
        %v965 = vsel %vm961, %v775, -1e+30
        %v966 = vsel %vm962, %v777, -1e+30
        %v967 = vsel %vm959, %v825, -1e+30
        %v968 = vsel %vm960, %v827, -1e+30
        %v969 = vsel %vm961, %v830, -1e+30
        %v970 = vsel %vm962, %v832, -1e+30
        %v971 = vsel %vm959, %v880, -1e+30
        %v972 = vsel %vm960, %v882, -1e+30
        %v973 = vsel %vm961, %v885, -1e+30
        %v974 = vsel %vm962, %v887, -1e+30
        %v975 = vsel %vm959, %v935, -1e+30
        %v976 = vsel %vm960, %v937, -1e+30
        %v977 = vsel %vm961, %v940, -1e+30
        %v978 = vsel %vm962, %v942, -1e+30
        %vm979 = vcmask 261120
        %v980 = vsel %vm979, %v963, -inf
        %981 = vmax.xlane.f32.xlu0 %v980
        %v982 = vpop.xlane.xlu0 %981
        %v983 = vsel %vm979, %v964, -inf
        %984 = vmax.xlane.f32.xlu0 %v983
        %v985 = vpop.xlane.xlu0 %984
        %v986 = vsel %vm979, %v965, -inf
        %987 = vmax.xlane.f32.xlu0 %v986
        %v988 = vpop.xlane.xlu0 %987
        %v989 = vsel %vm979, %v966, -inf
        %990 = vmax.xlane.f32.xlu0 %v989
        %v991 = vpop.xlane.xlu0 %990
        %v992 = vsel %vm979, %v967, -inf
        %993 = vmax.xlane.f32.xlu0 %v992
        %v994 = vpop.xlane.xlu0 %993
        %v995 = vsel %vm979, %v968, -inf
        %996 = vmax.xlane.f32.xlu0 %v995
        %v997 = vpop.xlane.xlu0 %996
        %v998 = vsel %vm979, %v969, -inf
        %999 = vmax.xlane.f32.xlu0 %v998
        %v1000 = vpop.xlane.xlu0 %999
        %v1001 = vsel %vm979, %v970, -inf
        %1002 = vmax.xlane.f32.xlu0 %v1001
        %v1003 = vpop.xlane.xlu0 %1002
        %v1004 = vsel %vm979, %v971, -inf
        %1005 = vmax.xlane.f32.xlu0 %v1004
        %v1006 = vpop.xlane.xlu0 %1005
        %v1007 = vsel %vm979, %v972, -inf
        %1008 = vmax.xlane.f32.xlu0 %v1007
        %v1009 = vpop.xlane.xlu0 %1008
        %v1010 = vsel %vm979, %v973, -inf
        %1011 = vmax.xlane.f32.xlu0 %v1010
        %v1012 = vpop.xlane.xlu0 %1011
        %v1013 = vsel %vm979, %v974, -inf
        %1014 = vmax.xlane.f32.xlu0 %v1013
        %v1015 = vpop.xlane.xlu0 %1014
        %v1016 = vsel %vm979, %v975, -inf
        %1017 = vmax.xlane.f32.xlu0 %v1016
        %v1018 = vpop.xlane.xlu0 %1017
        %v1019 = vsel %vm979, %v976, -inf
        %1020 = vmax.xlane.f32.xlu0 %v1019
        %v1021 = vpop.xlane.xlu0 %1020
        %v1022 = vsel %vm979, %v977, -inf
        %1023 = vmax.xlane.f32.xlu0 %v1022
        %v1024 = vpop.xlane.xlu0 %1023
        %v1025 = vsel %vm979, %v978, -inf
        %1026 = vmax.xlane.f32.xlu0 %v1025
        %v1027 = vpop.xlane.xlu0 %1026
        %v1028 = vsub.f32 %v963, %v982
        %v1029 = vsub.f32 %v964, %v985
        %v1030 = vsub.f32 %v965, %v988
        %v1031 = vsub.f32 %v966, %v991
        %v1032 = vsub.f32 %v967, %v994
        %v1033 = vsub.f32 %v968, %v997
        %v1034 = vsub.f32 %v969, %v1000
        %v1035 = vsub.f32 %v970, %v1003
        %v1036 = vsub.f32 %v971, %v1006
        %v1037 = vsub.f32 %v972, %v1009
        %v1038 = vsub.f32 %v973, %v1012
        %v1039 = vsub.f32 %v974, %v1015
        %v1040 = vsub.f32 %v975, %v1018
        %v1041 = vsub.f32 %v976, %v1021
        %v1042 = vsub.f32 %v977, %v1024
        %v1043 = vsub.f32 %v978, %v1027
        %v1044 = vmul.f32 %v1028, 1.442695
        %v1045 = vpow.pop %v1044
        %v1046 = vmul.f32 %v1029, 1.442695
        %v1047 = vpow.pop %v1046
        %v1048 = vmul.f32 %v1030, 1.442695
        %v1049 = vpow.pop %v1048
        %v1050 = vmul.f32 %v1031, 1.442695
        %v1051 = vpow.pop %v1050
        %v1052 = vmul.f32 %v1032, 1.442695
        %v1053 = vpow.pop %v1052
        %v1054 = vmul.f32 %v1033, 1.442695
        %v1055 = vpow.pop %v1054
        %v1056 = vmul.f32 %v1034, 1.442695
        %v1057 = vpow.pop %v1056
        %v1058 = vmul.f32 %v1035, 1.442695
        %v1059 = vpow.pop %v1058
        %v1060 = vmul.f32 %v1036, 1.442695
        %v1061 = vpow.pop %v1060
        %v1062 = vmul.f32 %v1037, 1.442695
        %v1063 = vpow.pop %v1062
        %v1064 = vmul.f32 %v1038, 1.442695
        %v1065 = vpow.pop %v1064
        %v1066 = vmul.f32 %v1039, 1.442695
        %v1067 = vpow.pop %v1066
        %v1068 = vmul.f32 %v1040, 1.442695
        %v1069 = vpow.pop %v1068
        %v1070 = vmul.f32 %v1041, 1.442695
        %v1071 = vpow.pop %v1070
        %v1072 = vmul.f32 %v1042, 1.442695
        %v1073 = vpow.pop %v1072
        %v1074 = vmul.f32 %v1043, 1.442695
        %v1075 = vpow.pop %v1074
        %v1076 = vsel %vm979, %v1045, 0.0
        %1077 = vadd.xlane.f32.xlu0 %v1076
        %v1078 = vpop.xlane.xlu0 %1077
        %v1079 = vsel %vm979, %v1047, 0.0
        %1080 = vadd.xlane.f32.xlu0 %v1079
        %v1081 = vpop.xlane.xlu0 %1080
        %v1082 = vsel %vm979, %v1049, 0.0
        %1083 = vadd.xlane.f32.xlu0 %v1082
        %v1084 = vpop.xlane.xlu0 %1083
        %v1085 = vsel %vm979, %v1051, 0.0
        %1086 = vadd.xlane.f32.xlu0 %v1085
        %v1087 = vpop.xlane.xlu0 %1086
        %v1088 = vsel %vm979, %v1053, 0.0
        %1089 = vadd.xlane.f32.xlu0 %v1088
        %v1090 = vpop.xlane.xlu0 %1089
        %v1091 = vsel %vm979, %v1055, 0.0
        %1092 = vadd.xlane.f32.xlu0 %v1091
        %v1093 = vpop.xlane.xlu0 %1092
        %v1094 = vsel %vm979, %v1057, 0.0
        %1095 = vadd.xlane.f32.xlu0 %v1094
        %v1096 = vpop.xlane.xlu0 %1095
        %v1097 = vsel %vm979, %v1059, 0.0
        %1098 = vadd.xlane.f32.xlu0 %v1097
        %v1099 = vpop.xlane.xlu0 %1098
        %v1100 = vsel %vm979, %v1061, 0.0
        %1101 = vadd.xlane.f32.xlu0 %v1100
        %v1102 = vpop.xlane.xlu0 %1101
        %v1103 = vsel %vm979, %v1063, 0.0
        %1104 = vadd.xlane.f32.xlu0 %v1103
        %v1105 = vpop.xlane.xlu0 %1104
        %v1106 = vsel %vm979, %v1065, 0.0
        %1107 = vadd.xlane.f32.xlu0 %v1106
        %v1108 = vpop.xlane.xlu0 %1107
        %v1109 = vsel %vm979, %v1067, 0.0
        %1110 = vadd.xlane.f32.xlu0 %v1109
        %v1111 = vpop.xlane.xlu0 %1110
        %v1112 = vsel %vm979, %v1069, 0.0
        %1113 = vadd.xlane.f32.xlu0 %v1112
        %v1114 = vpop.xlane.xlu0 %1113
        %v1115 = vsel %vm979, %v1071, 0.0
        %1116 = vadd.xlane.f32.xlu0 %v1115
        %v1117 = vpop.xlane.xlu0 %1116
        %v1118 = vsel %vm979, %v1073, 0.0
        %1119 = vadd.xlane.f32.xlu0 %v1118
        %v1120 = vpop.xlane.xlu0 %1119
        %v1121 = vsel %vm979, %v1075, 0.0
        %1122 = vadd.xlane.f32.xlu0 %v1121
        %v1123 = vpop.xlane.xlu0 %1122
        %v1124 = vrcp.pop %v1078
        %v1125 = vrcp.pop %v1081
        %v1126 = vrcp.pop %v1084
        %v1127 = vrcp.pop %v1087
        %v1128 = vrcp.pop %v1090
        %v1129 = vrcp.pop %v1093
        %v1130 = vrcp.pop %v1096
        %v1131 = vrcp.pop %v1099
        %v1132 = vrcp.pop %v1102
        %v1133 = vrcp.pop %v1105
        %v1134 = vrcp.pop %v1108
        %v1135 = vrcp.pop %v1111
        %v1136 = vrcp.pop %v1114
        %v1137 = vrcp.pop %v1117
        %v1138 = vrcp.pop %v1120
        %v1139 = vrcp.pop %v1123
        %v1140 = vmul.f32 %v1045, %v1124
        %v1141 = vmul.f32 %v1047, %v1125
        %v1142 = vmul.f32 %v1049, %v1126
        %v1143 = vmul.f32 %v1051, %v1127
        %v1144 = vmul.f32 %v1053, %v1128
        %v1145 = vmul.f32 %v1055, %v1129
        %v1146 = vmul.f32 %v1057, %v1130
        %v1147 = vmul.f32 %v1059, %v1131
        %v1148 = vmul.f32 %v1061, %v1132
        %v1149 = vmul.f32 %v1063, %v1133
        %v1150 = vmul.f32 %v1065, %v1134
        %v1151 = vmul.f32 %v1067, %v1135
        %v1152 = vmul.f32 %v1069, %v1136
        %v1153 = vmul.f32 %v1071, %v1137
        %v1154 = vmul.f32 %v1073, %v1138
        %v1155 = vmul.f32 %v1075, %v1139
        %v1156 = vpack.c.bf16 %v1140, %v1140
        %v1157 = vpack.c.bf16 %v1141, %v1141
        %v1158 = vpack.c.bf16 %v1142, %v1142
        %v1159 = vpack.c.bf16 %v1143, %v1143
        %v1160 = vpack.c.bf16 %v1144, %v1144
        %v1161 = vpack.c.bf16 %v1145, %v1145
        %v1162 = vpack.c.bf16 %v1146, %v1146
        %v1163 = vpack.c.bf16 %v1147, %v1147
        %v1164 = vpack.c.bf16 %v1148, %v1148
        %v1165 = vpack.c.bf16 %v1149, %v1149
        %v1166 = vpack.c.bf16 %v1150, %v1150
        %v1167 = vpack.c.bf16 %v1151, %v1151
        %v1168 = vpack.c.bf16 %v1152, %v1152
        %v1169 = vpack.c.bf16 %v1153, %v1153
        %v1170 = vpack.c.bf16 %v1154, %v1154
        %v1171 = vpack.c.bf16 %v1155, %v1155
        %v1176 = vunpack.c.l.b16 %v1156
        %v1177 = vunpack.c.l.b16 %v1157
        %v1178 = vunpack.c.l.b16 %v1158
        %v1179 = vunpack.c.l.b16 %v1159
        %v1180 = vpack.c.b16 %v1177, %v1176
        %v1181 = vpack.c.b16 %v1179, %v1178
        %v1186 = vunpack.c.l.b16 %v707
        %v1187 = vunpack.c.l.b16 %v708
        %v1188 = vunpack.c.l.b16 %v709
        %v1189 = vunpack.c.l.b16 %v710
        %v1190 = vpack.c.b16 %v1187, %v1186
        %v1191 = vpack.c.b16 %v1189, %v1188
        %v1195 = vsel %vm979, %v1180, 0
        %v1198 = vsel %vm979, %v1181, 0
        %1200 = vmatpush.bf16.msra.mxu0 0
        %1201 = vmatpush.bf16.msra.mxu0 0
        %1202 = vmatpush.bf16.msra.mxu0 0
        %1203 = vmatpush.bf16.msra.mxu0 0
        %1204 = vmatpush.bf16.msra.mxu0 0
        %1205 = vmatpush.bf16.msra.mxu0 0
        %1206 = vmatpush.bf16.msra.mxu0 %v1191
        %1207 = vmatpush.bf16.msra.mxu0 %v1190
        %1208 = vmatmul.bf16.gmra.mxu0 %v1195
        %v1209 = vpop.f32.mrf.mxu0
        %v1210 = vadd.f32 0.0, %v1209
        %v1211 = vpop.f32.mrf.mxu0
        %v1212 = vadd.f32 0.0, %v1211
        %1213 = vmatmul.bf16.gmra.mxu0 %v1198
        %v1214 = vpop.f32.mrf.mxu0
        %v1215 = vadd.f32 0.0, %v1214
        %v1216 = vpop.f32.mrf.mxu0
        %v1217 = vadd.f32 0.0, %v1216
        %1218 = vdwg.mxu0
        %v1223 = vunpack.c.l.b16 %v1160
        %v1224 = vunpack.c.l.b16 %v1161
        %v1225 = vunpack.c.l.b16 %v1162
        %v1226 = vunpack.c.l.b16 %v1163
        %v1227 = vpack.c.b16 %v1224, %v1223
        %v1228 = vpack.c.b16 %v1226, %v1225
        %v1233 = vunpack.c.l.b16 %v711
        %v1234 = vunpack.c.l.b16 %v712
        %v1235 = vunpack.c.l.b16 %v713
        %v1236 = vunpack.c.l.b16 %v714
        %v1237 = vpack.c.b16 %v1234, %v1233
        %v1238 = vpack.c.b16 %v1236, %v1235
        %v1242 = vsel %vm979, %v1227, 0
        %v1245 = vsel %vm979, %v1228, 0
        %1247 = vmatpush.bf16.msra.mxu0 0
        %1248 = vmatpush.bf16.msra.mxu0 0
        %1249 = vmatpush.bf16.msra.mxu0 0
        %1250 = vmatpush.bf16.msra.mxu0 0
        %1251 = vmatpush.bf16.msra.mxu0 0
        %1252 = vmatpush.bf16.msra.mxu0 0
        %1253 = vmatpush.bf16.msra.mxu0 %v1238
        %1254 = vmatpush.bf16.msra.mxu0 %v1237
        %1255 = vmatmul.bf16.gmra.mxu0 %v1242
        %v1256 = vpop.f32.mrf.mxu0
        %v1257 = vadd.f32 0.0, %v1256
        %v1258 = vpop.f32.mrf.mxu0
        %v1259 = vadd.f32 0.0, %v1258
        %1260 = vmatmul.bf16.gmra.mxu0 %v1245
        %v1261 = vpop.f32.mrf.mxu0
        %v1262 = vadd.f32 0.0, %v1261
        %v1263 = vpop.f32.mrf.mxu0
        %v1264 = vadd.f32 0.0, %v1263
        %1265 = vdwg.mxu0
        %v1270 = vunpack.c.l.b16 %v1164
        %v1271 = vunpack.c.l.b16 %v1165
        %v1272 = vunpack.c.l.b16 %v1166
        %v1273 = vunpack.c.l.b16 %v1167
        %v1274 = vpack.c.b16 %v1271, %v1270
        %v1275 = vpack.c.b16 %v1273, %v1272
        %v1280 = vunpack.c.l.b16 %v715
        %v1281 = vunpack.c.l.b16 %v716
        %v1282 = vunpack.c.l.b16 %v717
        %v1283 = vunpack.c.l.b16 %v718
        %v1284 = vpack.c.b16 %v1281, %v1280
        %v1285 = vpack.c.b16 %v1283, %v1282
        %v1289 = vsel %vm979, %v1274, 0
        %v1292 = vsel %vm979, %v1275, 0
        %1294 = vmatpush.bf16.msra.mxu0 0
        %1295 = vmatpush.bf16.msra.mxu0 0
        %1296 = vmatpush.bf16.msra.mxu0 0
        %1297 = vmatpush.bf16.msra.mxu0 0
        %1298 = vmatpush.bf16.msra.mxu0 0
        %1299 = vmatpush.bf16.msra.mxu0 0
        %1300 = vmatpush.bf16.msra.mxu0 %v1285
        %1301 = vmatpush.bf16.msra.mxu0 %v1284
        %1302 = vmatmul.bf16.gmra.mxu0 %v1289
        %v1303 = vpop.f32.mrf.mxu0
        %v1304 = vadd.f32 0.0, %v1303
        %v1305 = vpop.f32.mrf.mxu0
        %v1306 = vadd.f32 0.0, %v1305
        %1307 = vmatmul.bf16.gmra.mxu0 %v1292
        %v1308 = vpop.f32.mrf.mxu0
        %v1309 = vadd.f32 0.0, %v1308
        %v1310 = vpop.f32.mrf.mxu0
        %v1311 = vadd.f32 0.0, %v1310
        %1312 = vdwg.mxu0
        %v1317 = vunpack.c.l.b16 %v1168
        %v1318 = vunpack.c.l.b16 %v1169
        %v1319 = vunpack.c.l.b16 %v1170
        %v1320 = vunpack.c.l.b16 %v1171
        %v1321 = vpack.c.b16 %v1318, %v1317
        %v1322 = vpack.c.b16 %v1320, %v1319
        %v1327 = vunpack.c.l.b16 %v719
        %v1328 = vunpack.c.l.b16 %v720
        %v1329 = vunpack.c.l.b16 %v721
        %v1330 = vunpack.c.l.b16 %v722
        %v1331 = vpack.c.b16 %v1328, %v1327
        %v1332 = vpack.c.b16 %v1330, %v1329
        %v1336 = vsel %vm979, %v1321, 0
        %v1339 = vsel %vm979, %v1322, 0
        %1341 = vmatpush.bf16.msra.mxu0 0
        %1342 = vmatpush.bf16.msra.mxu0 0
        %1343 = vmatpush.bf16.msra.mxu0 0
        %1344 = vmatpush.bf16.msra.mxu0 0
        %1345 = vmatpush.bf16.msra.mxu0 0
        %1346 = vmatpush.bf16.msra.mxu0 0
        %1347 = vmatpush.bf16.msra.mxu0 %v1332
        %1348 = vmatpush.bf16.msra.mxu0 %v1331
        %1349 = vmatmul.bf16.gmra.mxu0 %v1336
        %v1350 = vpop.f32.mrf.mxu0
        %v1351 = vadd.f32 0.0, %v1350
        %v1352 = vpop.f32.mrf.mxu0
        %v1353 = vadd.f32 0.0, %v1352
        %1354 = vmatmul.bf16.gmra.mxu0 %v1339
        %v1355 = vpop.f32.mrf.mxu0
        %v1356 = vadd.f32 0.0, %v1355
        %v1357 = vpop.f32.mrf.mxu0
        %v1358 = vadd.f32 0.0, %v1357
        %1359 = vdwg.mxu0
        %1360 = vst.msk [vmem:[%s139] sm:$0xff] %vm747, %v1210
        %1361 = vst.msk [vmem:[%s139 + $0x8] sm:$0xff] %vm747, %v1212
        %1362 = vst.msk [vmem:[%s139 + $0x10] sm:$0xff] %vm747, %v1215
        %1363 = vst.msk [vmem:[%s139 + $0x18] sm:$0xff] %vm747, %v1217
        %1364 = vst.msk [vmem:[%s139 + $0x20] sm:$0xff] %vm747, %v1257
        %1365 = vst.msk [vmem:[%s139 + $0x28] sm:$0xff] %vm747, %v1259
        %1366 = vst.msk [vmem:[%s139 + $0x30] sm:$0xff] %vm747, %v1262
        %1367 = vst.msk [vmem:[%s139 + $0x38] sm:$0xff] %vm747, %v1264
        %1368 = vst.msk [vmem:[%s139 + $0x40] sm:$0xff] %vm747, %v1304
        %1369 = vst.msk [vmem:[%s139 + $0x48] sm:$0xff] %vm747, %v1306
        %1370 = vst.msk [vmem:[%s139 + $0x50] sm:$0xff] %vm747, %v1309
        %1371 = vst.msk [vmem:[%s139 + $0x58] sm:$0xff] %vm747, %v1311
        %1372 = vst.msk [vmem:[%s139 + $0x60] sm:$0xff] %vm747, %v1351
        %1373 = vst.msk [vmem:[%s139 + $0x68] sm:$0xff] %vm747, %v1353
        %1374 = vst.msk [vmem:[%s139 + $0x70] sm:$0xff] %vm747, %v1356
        %1375 = vst.msk [vmem:[%s139 + $0x78] sm:$0xff] %vm747, %v1358
        %s1376 = sand.u32 %s71, 1
        %s1377 = scalar_lea.sflag [#allocation3], %s1376
        %s1378 = sand.u32 %s71, 1
        %s1379 = smul.addr %s1378, 128
        %s1380 = scalar_lea.vmem [#allocation2], %s1379
        // Predicated region
        $region29: #{tpu_custom_call.1} parent=27 // pred_check
          %p1381 = pneg %p81
        $region30: #{tpu_custom_call.1} parent=27 // pred_check_branch
          %1383 = sbr.rel (%p1381) target = $region32
        $region31: #{tpu_custom_call.1} parent=27 // pred_region
          %s1384 = smul.u32 4, %s16
          %1386 = vsyncadd %s1377, 0
          %s1387 = smul.addr %s1384, 4
          %s1388 = smul.addr %s1387, 8
          %s1389 = scalar_lea.hbm %s2, %s1388
          %s1390 = sshll.u32 %s1380, 4
          %s1391 = int_to_ptr.vmem [resolvable:$true] %s1390
          %s1392 = sshll.u32 %s1389, 4
          %s1393 = int_to_ptr.hbm [resolvable:$true] %s1392
          %1398 = dma.vmem_to_hbm [thread:$0]  %s1391, 2048, %s1393, %s1377, 128, 128, 8
        $region32: #{tpu_custom_call.1} parent=27 // pred_fallthru
          _
      $region28: #{tpu_custom_call.1} parent=5 // pred_fallthru
        _
      %p1399 = scmp.le.s32.totalorder 2, %s11
      // Predicated region
      $region33: #{tpu_custom_call.1} parent=5 // pred_check
        %p1400 = pneg %p1399
      $region34: #{tpu_custom_call.1} parent=5 // pred_check_branch
        %1402 = sbr.rel (%p1400) target = $region36
      $region35: #{tpu_custom_call.1} parent=5 // pred_region
        %s1403 = ssub.s32 %s11, 2
        // Predicated region
        $region37: #{tpu_custom_call.1} parent=35 // pred_check
          %p1404 = pneg %p87
        $region38: #{tpu_custom_call.1} parent=35 // pred_check_branch
          %1406 = sbr.rel (%p1404) target = $region40
        $region39: #{tpu_custom_call.1} parent=35 // pred_region
          %s1407 = sand.u32 %s72, 1
          %s1408 = scalar_lea.sflag [#allocation3], %s1407
          %s1409 = sand.u32 %s72, 1
          %s1410 = smul.addr %s1409, 128
          %s1411 = scalar_lea.vmem [#allocation2], %s1410
          %1413 = dma.done %s1408, 2048
        $region40: #{tpu_custom_call.1} parent=35 // pred_fallthru
          _
      $region36: #{tpu_custom_call.1} parent=5 // pred_fallthru
        _
    $region6: #{tpu_custom_call.1} parent=1 // loop_footer
      %s15 = sadd.s32 1, %s11
    $region7: #{tpu_custom_call.1} parent=1 // loop_footer_branch
      %10 = sbr.rel target = $region3
    $region8: #{tpu_custom_call.1} parent=1 // loop_exit
      _
    %1414 = vsyncpa [#allocation3], 1
    %s1415 = scalar_lea.sflag [#allocation3], 1
    %1416 = vsyncpa %s1415, 1

</llo_original>
